<compile_context>
chip_gen: v7x
topology: tpu7x:2x2x1
jax: 0.10.0
libtpu: 0.0.40
codegen_flags: <defaults>
</compile_context>

<pallas_src>
import functools
import math

import jax
import jax.numpy as jnp
from jax.experimental import pallas as pl
from jax.experimental.pallas import tpu as pltpu

# Loss hyper-parameters (PyTorch module defaults).
OMEGA = 14.0
THETA = 0.5
EPSILON = 1.0
ALPHA = 2.1

LANES = 128
SUBLANES = 8
MAX_BLOCK_ROWS = 4096          # (4096, 128) f32 = 2 MiB per pipeline buffer

_T_OVER_E = THETA / EPSILON
_LN_T_OVER_E = math.log(_T_OVER_E)
_INV_T_OVER_E = 1.0 / _T_OVER_E
_INV_OMEGA = 1.0 / OMEGA
_INV_EPSILON = 1.0 / EPSILON


def _awl_kernel(pred_ref, targ_ref, out_ref, acc_ref, *,
                valid_rows, block_rows, total_blocks, steps_per_shard):
    """Accumulates a (8, 128) vreg of partial adaptive-wing-loss sums."""
    j = pl.program_id(0)   # parallel shard (TensorCore on v7x)
    i = pl.program_id(1)   # sequential step within the shard

    @pl.when(i == 0)
    def _():
        acc_ref[...] = jnp.zeros_like(acc_ref)

    y = targ_ref[...].astype(jnp.float32)
    y_hat = pred_ref[...].astype(jnp.float32)

    dy = jnp.abs(y - y_hat)
    a_m_y = ALPHA - y
    in1 = dy < THETA                       # branch-1 lanes (|y - y_hat| < theta)

    # Fused transcendental chain: one log, one exp shared by both branches.
    #   branch 1 power: (dy / omega)       ** (alpha - y)   (matches the
    #                                                        PyTorch module)
    #   branch 2 power: (theta / epsilon)  ** (alpha - y)
    t = jnp.where(in1, jnp.log(dy * _INV_OMEGA), _LN_T_OVER_E)
    p = jnp.exp(a_m_y * t)

    # Branch-2 linear coefficient A (garbage in branch-1 lanes, but finite and
    # discarded by the select below).  Approx EUP reciprocal: forward-only,
    # error ~2^-12 relative, well inside the validation tolerance.
    inv_1p_p = pl.reciprocal(1.0 + p, approx=True)
    A = (OMEGA * _INV_EPSILON * _INV_T_OVER_E) * inv_1p_p * a_m_y * p

    # loss1 = omega*log1p(p)                               (dy <  theta)
    # loss2 = A*dy - C = A*(dy - theta) + omega*log1p(p)   (dy >= theta)
    loss = OMEGA * jnp.log1p(p) + jnp.where(in1, 0.0, A * (dy - THETA))

    blk = j * steps_per_shard + i
    is_interior = blk < (total_blocks - 1)

    @pl.when(is_interior)
    def _():
        # Interior blocks are fully covered by valid rows: unmasked VALU
        # accumulation of vreg groups into the (8, 128) accumulator.
        acc_ref[...] += jnp.sum(loss.reshape(-1, SUBLANES, LANES), axis=0)

    @pl.when(jnp.logical_not(is_interior))
    def _():
        # Last real block (its OOB rows hold unspecified data) and clamped
        # overflow blocks of an over-provisioned shard: mask by row index
        # (no flat-index int32 overflow risk).  Zero-padded lane-tail rows
        # pass the mask but contribute exactly 0.
        row_ids = (blk * block_rows
                   + jax.lax.broadcasted_iota(jnp.int32, loss.shape, 0))
        masked = jnp.where(row_ids < valid_rows, loss, 0.0)
        acc_ref[...] += jnp.sum(masked.reshape(-1, SUBLANES, LANES), axis=0)

    @pl.when(i == pl.num_programs(1) - 1)
    def _():
        out_ref[0] = acc_ref[...]          # (8, 128) partials for shard j


def _num_shards() -> int:
    """2 TensorCores per chip on v7x, 1 on v5e/v6e."""
    try:
        kind = jax.devices()[0].device_kind.lower()
    except Exception:
        return 1
    return 2 if "v7" in kind else 1


def adaptive_wing_loss(pred, target):
    """JAX/Pallas equivalent of AdaptiveWingLoss().forward(pred, target)."""
    assert pred.shape == target.shape
    n_elems = pred.size

    # Lane-dense 2D view; only pad (a copy) when the flat size is not a
    # multiple of one minimal (8, 128) tile.  Padded zeros contribute 0 loss.
    tile_elems = SUBLANES * LANES
    padded = pl.cdiv(n_elems, tile_elems) * tile_elems
    flat_p = pred.reshape(-1)
    flat_t = target.reshape(-1)
    if padded != n_elems:
        flat_p = jnp.pad(flat_p, (0, padded - n_elems))
        flat_t = jnp.pad(flat_t, (0, padded - n_elems))
    rows = padded // LANES
    p2d = flat_p.reshape(rows, LANES)
    t2d = flat_t.reshape(rows, LANES)

    num_shards = _num_shards()
    block_rows = min(MAX_BLOCK_ROWS, rows)        # rows is a multiple of 8
    total_blocks = pl.cdiv(rows, block_rows)
    steps_per_shard = pl.cdiv(total_blocks, num_shards)

    def in_map(j, i):
        # Clamp overflow grid cells onto the last real block; the kernel's
        # row mask zeroes their contribution.
        blk = jnp.minimum(j * steps_per_shard + i, total_blocks - 1)
        return (blk, 0)

    kernel = functools.partial(
        _awl_kernel,
        valid_rows=rows,
        block_rows=block_rows,
        total_blocks=total_blocks,
        steps_per_shard=steps_per_shard,
    )

    cost = pl.CostEstimate(
        flops=20 * padded,
        transcendentals=4 * padded,
        bytes_accessed=(padded * (p2d.dtype.itemsize + t2d.dtype.itemsize)
                        + num_shards * SUBLANES * LANES * 4),
    )

    partials = pl.pallas_call(
        kernel,
        out_shape=jax.ShapeDtypeStruct((num_shards, SUBLANES, LANES),
                                       jnp.float32),
        grid_spec=pltpu.PrefetchScalarGridSpec(
            num_scalar_prefetch=0,
            grid=(num_shards, steps_per_shard),
            in_specs=[
                pl.BlockSpec((block_rows, LANES), in_map),
                pl.BlockSpec((block_rows, LANES), in_map),
            ],
            out_specs=pl.BlockSpec((1, SUBLANES, LANES),
                                   lambda j, i: (j, 0, 0)),
            scratch_shapes=[pltpu.VMEM((SUBLANES, LANES), jnp.float32)],
        ),
        compiler_params=pltpu.CompilerParams(
            dimension_semantics=("parallel", "arbitrary"),
            vmem_limit_bytes=32 * 1024 * 1024),
        cost_estimate=cost,
    )(p2d, t2d)

    # PyTorch denominator (len(loss1) + len(loss2)) == total element count.
    return jnp.sum(partials) / jnp.float32(n_elems)


if __name__ == "__main__":
    key = jax.random.PRNGKey(0)
    kp, kt = jax.random.split(key)
    B, N, H, W = 2, 4, 16, 16
    # Heatmap-like inputs in [0, 1] (both loss branches are exercised).
    pred = jax.random.uniform(kp, (B, N, H, W), dtype=jnp.float32)
    target = jax.random.uniform(kt, (B, N, H, W), dtype=jnp.float32)

    loss = adaptive_wing_loss(pred, target)
    jax.block_until_ready(loss)

    # Pure-JAX reference of the PyTorch module (exact pow / reciprocal).
    dy = jnp.abs(target - pred)
    amy = ALPHA - target
    l1 = OMEGA * jnp.log1p(jnp.power(dy / OMEGA, amy))
    pw = jnp.power(THETA / EPSILON, amy)
    A = (OMEGA * (1.0 / (1.0 + pw)) * amy
         * jnp.power(THETA / EPSILON, amy - 1.0) / EPSILON)
    C = THETA * A - OMEGA * jnp.log1p(pw)
    l2 = A * dy - C
    ref = jnp.mean(jnp.where(dy < THETA, l1, l2))
    assert jnp.allclose(loss, ref, rtol=5e-3, atol=5e-3), (loss, ref)

    print("KERNEL_OK")
</pallas_src>

<mosaic_0001>
module attributes {stable_mosaic.version = 11 : i64} {
  func.func @_awl_kernel(%arg0: i32, %arg1: i32, %arg2: memref<16x128xf32, #tpu.memory_space<vmem>>, %arg3: memref<16x128xf32, #tpu.memory_space<vmem>>, %arg4: memref<1x8x128xf32, #tpu.memory_space<vmem>>, %arg5: memref<8x128xf32, #tpu.memory_space<vmem>>) attributes {dimension_semantics = [#tpu.dimension_semantics<parallel>, #tpu.dimension_semantics<arbitrary>], iteration_bounds = array<i64: 1, 1>, scalar_prefetch = 0 : i64, scratch_operands = 1 : i64, tpu.core_type = #tpu.core_type<tc>, window_params = [{transform_indices = @transform_0, window_bounds = array<i64: 16, 128>}, {transform_indices = @transform_1, window_bounds = array<i64: 16, 128>}, {transform_indices = @transform_2, window_bounds = array<i64: 1, 8, 128>}]} {
    %c0_i32 = arith.constant 0 : i32
    %0 = arith.cmpi eq, %arg1, %c0_i32 : i32
    %1 = arith.extui %0 : i1 to i32
    %c0_i32_0 = arith.constant 0 : i32
    %2 = arith.cmpi ne, %1, %c0_i32_0 : i32
    scf.if %2 {
      %cst_17 = arith.constant 0.000000e+00 : f32
      %45 = vector.broadcast %cst_17 : f32 to vector<8x128xf32>
      %c0_18 = arith.constant 0 : index
      %c0_19 = arith.constant 0 : index
      %46 = vector.load %arg5[%c0_18, %c0_19] : memref<8x128xf32, #tpu.memory_space<vmem>>, vector<8x128xf32>
      tpu.vector_store %arg5[%c0_18, %c0_19], %45 {strides = array<i32>} : memref<8x128xf32, #tpu.memory_space<vmem>>, vector<8x128xf32>,
    } else {
    }
    %c0 = arith.constant 0 : index
    %c0_1 = arith.constant 0 : index
    %3 = vector.load %arg3[%c0, %c0_1] : memref<16x128xf32, #tpu.memory_space<vmem>>, vector<16x128xf32>
    %c0_2 = arith.constant 0 : index
    %c0_3 = arith.constant 0 : index
    %4 = vector.load %arg2[%c0_2, %c0_3] : memref<16x128xf32, #tpu.memory_space<vmem>>, vector<16x128xf32>
    %5 = arith.subf %3, %4 : vector<16x128xf32>
    %6 = math.absf %5 : vector<16x128xf32>
    %cst = arith.constant 2.100000e+00 : f32
    %7 = vector.broadcast %cst : f32 to vector<16x128xf32>
    %8 = arith.subf %7, %3 : vector<16x128xf32>
    %cst_4 = arith.constant 5.000000e-01 : f32
    %9 = vector.broadcast %cst_4 : f32 to vector<16x128xf32>
    %10 = arith.cmpf olt, %6, %9 : vector<16x128xf32>
    %cst_5 = arith.constant 0.0714285746 : f32
    %11 = vector.broadcast %cst_5 : f32 to vector<16x128xf32>
    %12 = arith.mulf %6, %11 : vector<16x128xf32>
    %13 = math.log %12 : vector<16x128xf32>
    %cst_6 = arith.constant -0.693147182 : f32
    %14 = vector.broadcast %cst_6 : f32 to vector<16x128xf32>
    %15 = arith.select %10, %13, %14 : vector<16x128xi1>, vector<16x128xf32>
    %16 = arith.mulf %8, %15 : vector<16x128xf32>
    %17 = math.exp %16 : vector<16x128xf32>
    %cst_7 = arith.constant 1.000000e+00 : f32
    %18 = vector.broadcast %cst_7 : f32 to vector<16x128xf32>
    %19 = arith.addf %18, %17 : vector<16x128xf32>
    %20 = tpu.reciprocal %19 {approx = true} : vector<16x128xf32> -> vector<16x128xf32>
    %cst_8 = arith.constant 2.800000e+01 : f32
    %21 = vector.broadcast %cst_8 : f32 to vector<16x128xf32>
    %22 = arith.mulf %21, %20 : vector<16x128xf32>
    %23 = arith.mulf %22, %8 : vector<16x128xf32>
    %24 = arith.mulf %23, %17 : vector<16x128xf32>
    %25 = math.log1p %17 : vector<16x128xf32>
    %cst_9 = arith.constant 1.400000e+01 : f32
    %26 = vector.broadcast %cst_9 : f32 to vector<16x128xf32>
    %27 = arith.mulf %26, %25 : vector<16x128xf32>
    %cst_10 = arith.constant 5.000000e-01 : f32
    %28 = vector.broadcast %cst_10 : f32 to vector<16x128xf32>
    %29 = arith.subf %6, %28 : vector<16x128xf32>
    %30 = arith.mulf %24, %29 : vector<16x128xf32>
    %cst_11 = arith.constant 0.000000e+00 : f32
    %31 = vector.broadcast %cst_11 : f32 to vector<16x128xf32>
    %32 = arith.select %10, %31, %30 : vector<16x128xi1>, vector<16x128xf32>
    %33 = arith.addf %27, %32 : vector<16x128xf32>
    %c1_i32 = arith.constant 1 : i32
    %34 = arith.muli %arg0, %c1_i32 : i32
    %35 = arith.addi %34, %arg1 : i32
    %c0_i32_12 = arith.constant 0 : i32
    %36 = arith.cmpi slt, %35, %c0_i32_12 : i32
    %37 = arith.extui %36 : i1 to i32
    %c0_i32_13 = arith.constant 0 : i32
    %38 = arith.cmpi ne, %37, %c0_i32_13 : i32
    scf.if %38 {
      %c0_17 = arith.constant 0 : index
      %c0_18 = arith.constant 0 : index
      %45 = vector.load %arg5[%c0_17, %c0_18] : memref<8x128xf32, #tpu.memory_space<vmem>>, vector<8x128xf32>
      %46 = vector.shape_cast %33 : vector<16x128xf32> to vector<2x8x128xf32>
      %cst_19 = arith.constant dense<0.000000e+00> : vector<8x128xf32>
      %47 = vector.multi_reduction <add>, %46, %cst_19 [0] : vector<2x8x128xf32> to vector<8x128xf32>
      %48 = arith.addf %45, %47 : vector<8x128xf32>
      %c0_20 = arith.constant 0 : index
      %c0_21 = arith.constant 0 : index
      %49 = vector.load %arg5[%c0_20, %c0_21] : memref<8x128xf32, #tpu.memory_space<vmem>>, vector<8x128xf32>
      tpu.vector_store %arg5[%c0_20, %c0_21], %48 {strides = array<i32>} : memref<8x128xf32, #tpu.memory_space<vmem>>, vector<8x128xf32>,
    } else {
    }
    %true = arith.constant true
    %39 = arith.xori %36, %true : i1
    %40 = arith.extui %39 : i1 to i32
    %c0_i32_14 = arith.constant 0 : i32
    %41 = arith.cmpi ne, %40, %c0_i32_14 : i32
    scf.if %41 {
      %c16_i32 = arith.constant 16 : i32
      %45 = arith.muli %35, %c16_i32 : i32
      %46 = tpu.iota {dimensions = array<i32: 0>} : vector<16x128xi32>
      %47 = vector.broadcast %45 : i32 to vector<16x128xi32>
      %48 = arith.addi %47, %46 : vector<16x128xi32>
      %c16_i32_17 = arith.constant 16 : i32
      %49 = vector.broadcast %c16_i32_17 : i32 to vector<16x128xi32>
      %50 = arith.cmpi slt, %48, %49 : vector<16x128xi32>
      %cst_18 = arith.constant 0.000000e+00 : f32
      %51 = vector.broadcast %cst_18 : f32 to vector<16x128xf32>
      %52 = arith.select %50, %33, %51 : vector<16x128xi1>, vector<16x128xf32>
      %c0_19 = arith.constant 0 : index
      %c0_20 = arith.constant 0 : index
      %53 = vector.load %arg5[%c0_19, %c0_20] : memref<8x128xf32, #tpu.memory_space<vmem>>, vector<8x128xf32>
      %54 = vector.shape_cast %52 : vector<16x128xf32> to vector<2x8x128xf32>
      %cst_21 = arith.constant dense<0.000000e+00> : vector<8x128xf32>
      %55 = vector.multi_reduction <add>, %54, %cst_21 [0] : vector<2x8x128xf32> to vector<8x128xf32>
      %56 = arith.addf %53, %55 : vector<8x128xf32>
      %c0_22 = arith.constant 0 : index
      %c0_23 = arith.constant 0 : index
      %57 = vector.load %arg5[%c0_22, %c0_23] : memref<8x128xf32, #tpu.memory_space<vmem>>, vector<8x128xf32>
      tpu.vector_store %arg5[%c0_22, %c0_23], %56 {strides = array<i32>} : memref<8x128xf32, #tpu.memory_space<vmem>>, vector<8x128xf32>,
    } else {
    }
    %c0_i32_15 = arith.constant 0 : i32
    %42 = arith.cmpi eq, %arg1, %c0_i32_15 : i32
    %43 = arith.extui %42 : i1 to i32
    %c0_i32_16 = arith.constant 0 : i32
    %44 = arith.cmpi ne, %43, %c0_i32_16 : i32
    scf.if %44 {
      %c0_17 = arith.constant 0 : index
      %c0_18 = arith.constant 0 : index
      %45 = vector.load %arg5[%c0_17, %c0_18] : memref<8x128xf32, #tpu.memory_space<vmem>>, vector<8x128xf32>
      %c0_19 = arith.constant 0 : index
      %c0_20 = arith.constant 0 : index
      %c0_21 = arith.constant 0 : index
      %46 = vector.load %arg4[%c0_19, %c0_20, %c0_21] : memref<1x8x128xf32, #tpu.memory_space<vmem>>, vector<1x8x128xf32>
      %47 = vector.shape_cast %46 : vector<1x8x128xf32> to vector<8x128xf32>
      %48 = vector.shape_cast %45 : vector<8x128xf32> to vector<1x8x128xf32>
      tpu.vector_store %arg4[%c0_19, %c0_20, %c0_21], %48 {strides = array<i32>} : memref<1x8x128xf32, #tpu.memory_space<vmem>>, vector<1x8x128xf32>,
    } else {
    }
    return
  }
  func.func @transform_0(%arg0: i32, %arg1: i32) -> (i32, i32) {
    %c1_i32 = arith.constant 1 : i32
    %0 = arith.muli %arg0, %c1_i32 : i32
    %1 = arith.addi %0, %arg1 : i32
    %c0_i32 = arith.constant 0 : i32
    %2 = arith.minsi %1, %c0_i32 : i32
    %c0_i32_0 = arith.constant 0 : i32
    %c0_i32_1 = arith.constant 0 : i32
    return %2, %c0_i32_0 : i32, i32
  }
  func.func @transform_1(%arg0: i32, %arg1: i32) -> (i32, i32) {
    %c1_i32 = arith.constant 1 : i32
    %0 = arith.muli %arg0, %c1_i32 : i32
    %1 = arith.addi %0, %arg1 : i32
    %c0_i32 = arith.constant 0 : i32
    %2 = arith.minsi %1, %c0_i32 : i32
    %c0_i32_0 = arith.constant 0 : i32
    %c0_i32_1 = arith.constant 0 : i32
    return %2, %c0_i32_0 : i32, i32
  }
  func.func @transform_2(%arg0: i32, %arg1: i32) -> (i32, i32, i32) {
    %c0_i32 = arith.constant 0 : i32
    %c0_i32_0 = arith.constant 0 : i32
    %c0_i32_1 = arith.constant 0 : i32
    return %arg0, %c0_i32, %c0_i32_0 : i32, i32, i32
  }
}

</mosaic_0001>

<llo_original>
// kernel: tpu_custom_call.1
$region0: #{tpu_custom_call.1}
  #allocation0 [shape = 'u32[]', space=smem, size = 0x4, offset = 0x4, fixed_abs, tag = 'smem constant byte address 0x4 - core index']
  #allocation1 [shape = 'u32[144,128]{1,0:T(1,128)}', space=vmem, size = 0x12000, scoped, tag = 'internal scratch']
  #allocation2 [shape = 'f32[8,128]{1,0:T(8,128)}', space=vmem, size = 0x1000, scoped, tag = 'scratch operand']
  %s0 = inlined_call_operand.hbm [shape: f32[16,128], index: 0, kind: input, shape index: {}]
  %s1 = inlined_call_operand.hbm [shape: f32[16,128], index: 1, kind: input, shape index: {}]
  %s2 = inlined_call_operand.hbm [shape: f32[1,8,128], index: 2, kind: output, shape index: {}]
  %s3 = sld [smem:[#allocation0]]
  $region42: #{tpu_custom_call.1} parent=0
    _
  %s5 = ssub.s32 1, %s3
  %s6 = scalar_select 0, %s5, %s3
  $region1: #{tpu_custom_call.1} parent=0
    #allocation3 [shape = 'u8[8192]{0}', space=vmem, size = 0x2000, scoped, tag = 'input window, operand 0, single buffered']
    #allocation4 [shape = 's32[1]{0}', space=sflag, size = 0x4, scoped, tag = 'scoped memory for tpu_custom_call.1']
    #allocation5 [shape = 's32[1]{0}', space=sflag, size = 0x4, scoped, tag = 'scoped memory for tpu_custom_call.1']
    #allocation6 [shape = 'u8[8192]{0}', space=vmem, size = 0x2000, scoped, tag = 'input window, operand 1, single buffered']
    #allocation7 [shape = 's32[1]{0}', space=sflag, size = 0x4, scoped, tag = 'scoped memory for tpu_custom_call.1']
    #allocation8 [shape = 'u8[4096]{0}', space=vmem, size = 0x1000, scoped, tag = 'output window, operand 0, single buffered']
    %7 = vsyncpa [#allocation4], 0
    %8 = vsyncpa [#allocation7], 0
    %9 = vsyncpa [#allocation5], 0
    // Predicated region
    $region2: #{tpu_custom_call.1} parent=1 // pred_check
      _
    $region3: #{tpu_custom_call.1} parent=1 // pred_check_branch
      %11 = sbr.rel (0) target = $region5
    $region4: #{tpu_custom_call.1} parent=1 // pred_region
      %s12 = sadd.s32 0, 0
      %p13 = scmp.lt.s32.totalorder %s12, 0
      %s14 = scalar_select %p13, %s12, 0
      %s15 = smul.u32 2, %s14
      %s17 = ssub.s32 256, 256
      %18 = vsyncadd [#allocation4], %s17
      %s19 = smul.addr %s15, 128
      %s20 = scalar_lea.hbm %s0, %s19
      %s21 = sshll.u32 [#allocation3], 4
      %s22 = int_to_ptr.vmem [resolvable:$true] %s21
      %27 = dma.hbm_to_vmem [thread:$0]  %s20, 256, %s22, [#allocation4], 128, 128, 8
    $region5: #{tpu_custom_call.1} parent=1 // pred_fallthru
      _
    // Predicated region
    $region6: #{tpu_custom_call.1} parent=1 // pred_check
      _
    $region7: #{tpu_custom_call.1} parent=1 // pred_check_branch
      %29 = sbr.rel (0) target = $region9
    $region8: #{tpu_custom_call.1} parent=1 // pred_region
      %s30 = sadd.s32 0, 0
      %p31 = scmp.lt.s32.totalorder %s30, 0
      %s32 = scalar_select %p31, %s30, 0
      %s33 = smul.u32 2, %s32
      %s35 = ssub.s32 256, 256
      %36 = vsyncadd [#allocation7], %s35
      %s37 = smul.addr %s33, 128
      %s38 = scalar_lea.hbm %s1, %s37
      %s39 = sshll.u32 [#allocation6], 4
      %s40 = int_to_ptr.vmem [resolvable:$true] %s39
      %45 = dma.hbm_to_vmem [thread:$0]  %s38, 256, %s40, [#allocation7], 128, 128, 8
    $region9: #{tpu_custom_call.1} parent=1 // pred_fallthru
      _
    // Predicated region
    $region10: #{tpu_custom_call.1} parent=1 // pred_check
      _
    $region11: #{tpu_custom_call.1} parent=1 // pred_check_branch
      %47 = sbr.rel (0) target = $region13
    $region12: #{tpu_custom_call.1} parent=1 // pred_region
      %48 = dma.done [#allocation4], 256
    $region13: #{tpu_custom_call.1} parent=1 // pred_fallthru
      _
    // Predicated region
    $region14: #{tpu_custom_call.1} parent=1 // pred_check
      _
    $region15: #{tpu_custom_call.1} parent=1 // pred_check_branch
      %50 = sbr.rel (0) target = $region17
    $region16: #{tpu_custom_call.1} parent=1 // pred_region
      %51 = dma.done [#allocation7], 256
    $region17: #{tpu_custom_call.1} parent=1 // pred_fallthru
      _
    %s52 = sadd.s32 0, 0
    %p53 = scmp.lt.s32.totalorder %s52, 0
    %s54 = scalar_select %p53, %s52, 0
    %s55 = smul.u32 2, %s54
    %s56 = sadd.s32 0, 0
    %p57 = scmp.lt.s32.totalorder %s56, 0
    %s58 = scalar_select %p57, %s56, 0
    %s59 = smul.u32 2, %s58
    %p60 = scmp.eq.s32.totalorder 0, 0
    // Predicated region
    $region18: #{tpu_custom_call.1} parent=1 // pred_check
      %p61 = pneg %p60
    $region19: #{tpu_custom_call.1} parent=1 // pred_check_branch
      %63 = sbr.rel (%p61) target = $region21
    $region20: #{tpu_custom_call.1} parent=1 // pred_region
      %64 = vst [vmem:[#allocation2] sm:$0xff] 0.0
    $region21: #{tpu_custom_call.1} parent=1 // pred_fallthru
      _
    %v65 = vld [vmem:[#allocation6] sm:$0xff]
    %v66 = vld [vmem:[#allocation6 + $0x8] sm:$0xff]
    %v67 = vld [vmem:[#allocation3] sm:$0xff]
    %v68 = vld [vmem:[#allocation3 + $0x8] sm:$0xff]
    %v69 = vsub.f32 %v65, %v67
    %v70 = vsub.f32 %v66, %v68
    %v71 = vand.u32 2147483647, %v69
    %v72 = vand.u32 2147483647, %v70
    %v73 = vsub.f32 2.1, %v65
    %v74 = vsub.f32 2.1, %v66
    %vm75 = vcmp.lt.f32.partialorder %v71, 0.5
    %vm76 = vcmp.lt.f32.partialorder %v72, 0.5
    %v77 = vmul.f32 %v71, 0.071428575
    %v78 = vmul.f32 %v72, 0.071428575
    %v79 = vlog2.pop %v77
    %v80 = vmul.f32 %v79, 0.6931472
    %v81 = vlog2.pop %v78
    %v82 = vmul.f32 %v81, 0.6931472
    %v83 = vsel %vm75, %v80, -0.6931472
    %v84 = vsel %vm76, %v82, -0.6931472
    %v85 = vmul.f32 %v73, %v83
    %v86 = vmul.f32 %v74, %v84
    %v87 = vmul.f32 %v85, 1.442695
    %v88 = vpow.pop %v87
    %v89 = vmul.f32 %v86, 1.442695
    %v90 = vpow.pop %v89
    %v91 = vadd.f32 %v88, 1.0
    %v92 = vadd.f32 %v90, 1.0
    %v93 = vrcp.pop %v91
    %v94 = vrcp.pop %v92
    %v95 = vmul.f32 %v93, 28.0
    %v96 = vmul.f32 %v94, 28.0
    %v97 = vmul.f32 %v95, %v73
    %v98 = vmul.f32 %v96, %v74
    %v99 = vmul.f32 %v97, %v88
    %v100 = vmul.f32 %v98, %v90
    %v101 = vadd.f32 %v88, 1.0
    %v102 = vlog2.pop %v101
    %v103 = vmul.f32 %v102, 0.6931472
    %v104 = vmul.f32 -0.5, %v88
    %v105 = vadd.f32 %v104, 1.0
    %v106 = vmul.f32 %v105, %v88
    %v107 = vand.u32 2147483647, %v88
    %vm108 = vcmp.lt.f32.partialorder %v107, 0.0004427343
    %v109 = vsel %vm108, %v106, %v103
    %v110 = vadd.f32 %v90, 1.0
    %v111 = vlog2.pop %v110
    %v112 = vmul.f32 %v111, 0.6931472
    %v113 = vmul.f32 -0.5, %v90
    %v114 = vadd.f32 %v113, 1.0
    %v115 = vmul.f32 %v114, %v90
    %v116 = vand.u32 2147483647, %v90
    %vm117 = vcmp.lt.f32.partialorder %v116, 0.0004427343
    %v118 = vsel %vm117, %v115, %v112
    %v119 = vmul.f32 %v109, 14.0
    %v120 = vmul.f32 %v118, 14.0
    %v121 = vsub.f32 %v71, 0.5
    %v122 = vsub.f32 %v72, 0.5
    %v123 = vmul.f32 %v99, %v121
    %v124 = vmul.f32 %v100, %v122
    %v125 = vsel %vm75, 0.0, %v123
    %v126 = vsel %vm76, 0.0, %v124
    %v127 = vadd.f32 %v119, %v125
    %v128 = vadd.f32 %v120, %v126
    %s129 = sadd.s32 0, 0
    %p130 = scmp.lt.s32.totalorder %s129, 0
    // Predicated region
    $region22: #{tpu_custom_call.1} parent=1 // pred_check
      %p131 = pneg %p130
    $region23: #{tpu_custom_call.1} parent=1 // pred_check_branch
      %133 = sbr.rel (%p131) target = $region25
    $region24: #{tpu_custom_call.1} parent=1 // pred_region
      %v134 = vld [vmem:[#allocation2] sm:$0xff]
      %v135 = vadd.f32 %v127, %v128
      %v136 = vadd.f32 %v134, %v135
      %137 = vst [vmem:[#allocation2] sm:$0xff] %v136
    $region25: #{tpu_custom_call.1} parent=1 // pred_fallthru
      _
    %p138 = scmp.ge.s32.totalorder %s129, 0
    // Predicated region
    $region26: #{tpu_custom_call.1} parent=1 // pred_check
      %p139 = pneg %p138
    $region27: #{tpu_custom_call.1} parent=1 // pred_check_branch
      %141 = sbr.rel (%p139) target = $region29
    $region28: #{tpu_custom_call.1} parent=1 // pred_region
      %s142 = smul.u32 %s129, 16
      %v143 = vlaneseq
      %v144 = vshrl.u32 %v143, 7
      %v145 = vadd.s32 %v144, 8
      %v146 = vstv %s142
      %v147 = vadd.s32 %v146, %v144
      %v148 = vadd.s32 %v146, %v145
      %vm149 = vcmp.lt.s32.totalorder %v147, 16
      %vm150 = vcmp.lt.s32.totalorder %v148, 16
      %v151 = vsel %vm149, %v127, 0.0
      %v152 = vsel %vm150, %v128, 0.0
      %v153 = vld [vmem:[#allocation2] sm:$0xff]
      %v154 = vadd.f32 %v151, %v152
      %v155 = vadd.f32 %v153, %v154
      %156 = vst [vmem:[#allocation2] sm:$0xff] %v155
    $region29: #{tpu_custom_call.1} parent=1 // pred_fallthru
      _
    // Predicated region
    $region30: #{tpu_custom_call.1} parent=1 // pred_check
      %p157 = pneg %p60
    $region31: #{tpu_custom_call.1} parent=1 // pred_check_branch
      %159 = sbr.rel (%p157) target = $region33
    $region32: #{tpu_custom_call.1} parent=1 // pred_region
      %v160 = vld [vmem:[#allocation2] sm:$0xff]
      %161 = vst [vmem:[#allocation8] sm:$0xff] %v160
    $region33: #{tpu_custom_call.1} parent=1 // pred_fallthru
      _
    // Predicated region
    $region34: #{tpu_custom_call.1} parent=1 // pred_check
      _
    $region35: #{tpu_custom_call.1} parent=1 // pred_check_branch
      %163 = sbr.rel (0) target = $region37
    $region36: #{tpu_custom_call.1} parent=1 // pred_region
      %s165 = ssub.s32 128, 128
      %166 = vsyncadd [#allocation5], %s165
      %s168 = sshll.u32 [#allocation8], 4
      %s169 = int_to_ptr.vmem [resolvable:$true] %s168
      %171 = dma.vmem_to_hbm [thread:$0]  %s169, 128, %s2, [#allocation5]
    $region37: #{tpu_custom_call.1} parent=1 // pred_fallthru
      _
    // Predicated region
    $region38: #{tpu_custom_call.1} parent=1 // pred_check
      _
    $region39: #{tpu_custom_call.1} parent=1 // pred_check_branch
      %173 = sbr.rel (0) target = $region41
    $region40: #{tpu_custom_call.1} parent=1 // pred_region
      %174 = dma.done [#allocation5], 128
    $region41: #{tpu_custom_call.1} parent=1 // pred_fallthru
      _
    %175 = vsyncpa [#allocation4], 1
    %176 = vsyncpa [#allocation7], 1
    %177 = vsyncpa [#allocation5], 1

</llo_original>
